<compile_context>
chip_gen: v6e
topology: v6e:2x2x1
jax: 0.10.0
libtpu: 0.0.40
codegen_flags: <defaults>
</compile_context>

<pallas_src>
import functools

import jax
import jax.numpy as jnp
from jax.experimental import pallas as pl
from jax.experimental.pallas import tpu as pltpu

N_H0, N_H1, N_OUT = 10, 5, 1


def _round_up(x, m):
    return ((x + m - 1) // m) * m


def _mlp_kernel(x_ref, w0_ref, b0_ref, w1_ref, b1_ref, w2_ref, b2_ref, o_ref):
    x = x_ref[...]                                                      # (TILE_B, F) bf16

    # dense0 + ReLU  (bf16 x bf16 -> f32 accumulate on the MXU)
    h0 = jnp.dot(x, w0_ref[...], preferred_element_type=jnp.float32)   # (TILE_B, 10)
    h0 = jnp.maximum(h0 + b0_ref[...], 0.0)                            # f32 VPU

    # dropout(p=0.5) -> identity (inference / eval mode)

    # dense1 + ReLU
    h1 = jnp.dot(h0, w1_ref[...], preferred_element_type=jnp.float32)  # (TILE_B, 5)
    h1 = jnp.maximum(h1 + b1_ref[...], 0.0)

    # output linear
    z = jnp.dot(h1, w2_ref[...], preferred_element_type=jnp.float32)   # (TILE_B, 1)
    z = z + b2_ref[...]

    # softmax over the last dim
    if N_OUT == 1:
        # Width-1 softmax is identically 1.0 for finite z; drop the XLU reduce and
        # the divide. exp(z - z) keeps the data dependence (no DCE of the matmuls)
        # and propagates NaN/Inf exactly like the full softmax would.
        o_ref[...] = jnp.exp(z - z)
    else:
        z = z - jnp.max(z, axis=-1, keepdims=True)
        e = jnp.exp(z)
        o_ref[...] = e * pl.reciprocal(jnp.sum(e, axis=-1, keepdims=True), approx=True)


@functools.partial(jax.jit, static_argnames=("tile_b",))
def test_module_forward(x, params, *, tile_b=512):
    """x: (B, n_features). params: dict of (in, out) weights and (1, out) biases."""
    B, F = x.shape

    # Batch tile: large & MXU-aligned when B is large (default 512); collapses to one
    # small sublane-aligned tile for tiny batches.
    eff_tile = max(8, min(tile_b, _round_up(B, 8)))
    b_pad = _round_up(B, eff_tile)
    if b_pad != B:
        x = jnp.pad(x, ((0, b_pad - B), (0, 0)))

    # x dominates HBM traffic -> carry it (and w0) in bf16; accumulation stays f32.
    x = x.astype(jnp.bfloat16)
    w0 = params["w0"].astype(jnp.bfloat16)

    grid = (b_pad // eff_tile,)

    def const_spec(shape):
        # Same block for every grid step -> weight/bias stays VMEM-resident.
        return pl.BlockSpec(shape, lambda i: (0, 0))

    out = pl.pallas_call(
        _mlp_kernel,
        out_shape=jax.ShapeDtypeStruct((b_pad, N_OUT), jnp.float32),
        grid=grid,
        in_specs=[
            pl.BlockSpec((eff_tile, F), lambda i: (i, 0)),   # x: tiled over batch
            const_spec((F, N_H0)),                           # w0 (bf16, resident)
            const_spec((1, N_H0)),                           # b0
            const_spec((N_H0, N_H1)),                        # w1
            const_spec((1, N_H1)),                           # b1
            const_spec((N_H1, N_OUT)),                       # w2
            const_spec((1, N_OUT)),                          # b2
        ],
        out_specs=pl.BlockSpec((eff_tile, N_OUT), lambda i: (i, 0)),
        compiler_params=pltpu.CompilerParams(
            dimension_semantics=("parallel",),      # megacore split of batch on v7x
            vmem_limit_bytes=32 * 1024 * 1024,      # explicit: safe within v7x 64 MiB
        ),
    )(x, w0, params["b0"], params["w1"], params["b1"], params["w2"], params["b2"])

    return out[:B]


def init_params(n_features, key):
    """Deterministic parameter init; weights stored transposed as (in, out)."""
    ks = jax.random.split(key, 6)

    def linear(kw, kb, fan_in, fan_out):
        # torch.nn.Linear default init: U(-1/sqrt(fan_in), 1/sqrt(fan_in))
        bound = 1.0 / jnp.sqrt(jnp.float32(fan_in))
        w = jax.random.uniform(kw, (fan_in, fan_out), jnp.float32, -bound, bound)
        b = jax.random.uniform(kb, (1, fan_out), jnp.float32, -bound, bound)
        return w, b

    w0, b0 = linear(ks[0], ks[1], n_features, N_H0)
    w1, b1 = linear(ks[2], ks[3], N_H0, N_H1)
    w2, b2 = linear(ks[4], ks[5], N_H1, N_OUT)
    return {"w0": w0, "b0": b0, "w1": w1, "b1": b1, "w2": w2, "b2": b2}


def _reference(x, p):
    h = jnp.maximum(x @ p["w0"] + p["b0"], 0.0)
    h = jnp.maximum(h @ p["w1"] + p["b1"], 0.0)
    z = h @ p["w2"] + p["b2"]
    return jax.nn.softmax(z, axis=-1)


if __name__ == "__main__":
    key = jax.random.PRNGKey(0)
    k_x, k_p = jax.random.split(key)

    batch, n_features = 8, 32
    x = jax.random.normal(k_x, (batch, n_features), jnp.float32)
    params = init_params(n_features, k_p)

    out = test_module_forward(x, params)
    out = jax.block_until_ready(out)

    ref = _reference(x, params)
    assert out.shape == (batch, N_OUT), out.shape
    assert jnp.allclose(out, ref, atol=1e-5, rtol=1e-5), (out, ref)

    print("KERNEL_OK")
</pallas_src>

<mosaic_0001>
module attributes {stable_mosaic.version = 11 : i64} {
  func.func @_mlp_kernel(%arg0: i32, %arg1: memref<8x32xbf16, #tpu.memory_space<vmem>>, %arg2: memref<32x10xbf16, #tpu.memory_space<vmem>>, %arg3: memref<1x10xf32, #tpu.memory_space<vmem>>, %arg4: memref<10x5xf32, #tpu.memory_space<vmem>>, %arg5: memref<1x5xf32, #tpu.memory_space<vmem>>, %arg6: memref<5x1xf32, #tpu.memory_space<vmem>>, %arg7: memref<1x1xf32, #tpu.memory_space<vmem>>, %arg8: memref<8x1xf32, #tpu.memory_space<vmem>>) attributes {dimension_semantics = [#tpu.dimension_semantics<parallel>], iteration_bounds = array<i64: 1>, scalar_prefetch = 0 : i64, scratch_operands = 0 : i64, tpu.core_type = #tpu.core_type<tc>, window_params = [{transform_indices = @transform_0, window_bounds = array<i64: 8, 32>}, {pipeline_mode = #tpu.pipeline_mode<synchronous>, transform_indices = @transform_1, window_bounds = array<i64: 32, 10>}, {pipeline_mode = #tpu.pipeline_mode<synchronous>, transform_indices = @transform_2, window_bounds = array<i64: 1, 10>}, {pipeline_mode = #tpu.pipeline_mode<synchronous>, transform_indices = @transform_3, window_bounds = array<i64: 10, 5>}, {pipeline_mode = #tpu.pipeline_mode<synchronous>, transform_indices = @transform_4, window_bounds = array<i64: 1, 5>}, {pipeline_mode = #tpu.pipeline_mode<synchronous>, transform_indices = @transform_5, window_bounds = array<i64: 5, 1>}, {pipeline_mode = #tpu.pipeline_mode<synchronous>, transform_indices = @transform_6, window_bounds = array<i64: 1, 1>}, {transform_indices = @transform_7, window_bounds = array<i64: 8, 1>}]} {
    %c0 = arith.constant 0 : index
    %c0_0 = arith.constant 0 : index
    %0 = vector.load %arg1[%c0, %c0_0] : memref<8x32xbf16, #tpu.memory_space<vmem>>, vector<8x32xbf16>
    %c0_1 = arith.constant 0 : index
    %c0_2 = arith.constant 0 : index
    %1 = vector.load %arg2[%c0_1, %c0_2] : memref<32x10xbf16, #tpu.memory_space<vmem>>, vector<32x10xbf16>
    %cst = arith.constant dense<0.000000e+00> : vector<8x10xf32>
    %2 = tpu.matmul %0, %1, %cst {dimension_numbers = #tpu.dot_dimension_numbers<[1], [0], [0], [1], [0, 0, 1, 1], [], []>} : vector<8x32xbf16>, vector<32x10xbf16>, vector<8x10xf32> -> vector<8x10xf32>
    %c0_3 = arith.constant 0 : index
    %c0_4 = arith.constant 0 : index
    %3 = vector.load %arg3[%c0_3, %c0_4] : memref<1x10xf32, #tpu.memory_space<vmem>>, vector<1x10xf32>
    %4 = vector.broadcast %3 : vector<1x10xf32> to vector<8x10xf32>
    %5 = arith.addf %2, %4 : vector<8x10xf32>
    %cst_5 = arith.constant 0.000000e+00 : f32
    %6 = vector.broadcast %cst_5 : f32 to vector<8x10xf32>
    %7 = arith.maximumf %5, %6 : vector<8x10xf32>
    %c0_6 = arith.constant 0 : index
    %c0_7 = arith.constant 0 : index
    %8 = vector.load %arg4[%c0_6, %c0_7] : memref<10x5xf32, #tpu.memory_space<vmem>>, vector<10x5xf32>
    %cst_8 = arith.constant dense<0.000000e+00> : vector<8x5xf32>
    %9 = tpu.matmul %7, %8, %cst_8 {dimension_numbers = #tpu.dot_dimension_numbers<[1], [0], [0], [1], [0, 0, 1, 1], [], []>} : vector<8x10xf32>, vector<10x5xf32>, vector<8x5xf32> -> vector<8x5xf32>
    %c0_9 = arith.constant 0 : index
    %c0_10 = arith.constant 0 : index
    %10 = vector.load %arg5[%c0_9, %c0_10] : memref<1x5xf32, #tpu.memory_space<vmem>>, vector<1x5xf32>
    %11 = vector.broadcast %10 : vector<1x5xf32> to vector<8x5xf32>
    %12 = arith.addf %9, %11 : vector<8x5xf32>
    %cst_11 = arith.constant 0.000000e+00 : f32
    %13 = vector.broadcast %cst_11 : f32 to vector<8x5xf32>
    %14 = arith.maximumf %12, %13 : vector<8x5xf32>
    %c0_12 = arith.constant 0 : index
    %c0_13 = arith.constant 0 : index
    %15 = vector.load %arg6[%c0_12, %c0_13] : memref<5x1xf32, #tpu.memory_space<vmem>>, vector<5x1xf32>
    %cst_14 = arith.constant dense<0.000000e+00> : vector<8x1xf32>
    %16 = tpu.matmul %14, %15, %cst_14 {dimension_numbers = #tpu.dot_dimension_numbers<[1], [0], [0], [1], [0, 0, 1, 1], [], []>} : vector<8x5xf32>, vector<5x1xf32>, vector<8x1xf32> -> vector<8x1xf32>
    %c0_15 = arith.constant 0 : index
    %c0_16 = arith.constant 0 : index
    %17 = vector.load %arg7[%c0_15, %c0_16] : memref<1x1xf32, #tpu.memory_space<vmem>>, vector<1x1xf32>
    %18 = vector.broadcast %17 : vector<1x1xf32> to vector<8x1xf32>
    %19 = arith.addf %16, %18 : vector<8x1xf32>
    %20 = arith.subf %19, %19 : vector<8x1xf32>
    %21 = math.exp %20 : vector<8x1xf32>
    %c0_17 = arith.constant 0 : index
    %c0_18 = arith.constant 0 : index
    %22 = vector.load %arg8[%c0_17, %c0_18] : memref<8x1xf32, #tpu.memory_space<vmem>>, vector<8x1xf32>
    tpu.vector_store %arg8[%c0_17, %c0_18], %21 {strides = array<i32>} : memref<8x1xf32, #tpu.memory_space<vmem>>, vector<8x1xf32>,
    return
  }
  func.func @transform_0(%arg0: i32) -> (i32, i32) {
    %c0_i32 = arith.constant 0 : i32
    %c0_i32_0 = arith.constant 0 : i32
    return %arg0, %c0_i32 : i32, i32
  }
  func.func @transform_1(%arg0: i32) -> (i32, i32) {
    %c0_i32 = arith.constant 0 : i32
    %c0_i32_0 = arith.constant 0 : i32
    %c0_i32_1 = arith.constant 0 : i32
    return %c0_i32, %c0_i32_0 : i32, i32
  }
  func.func @transform_2(%arg0: i32) -> (i32, i32) {
    %c0_i32 = arith.constant 0 : i32
    %c0_i32_0 = arith.constant 0 : i32
    %c0_i32_1 = arith.constant 0 : i32
    return %c0_i32, %c0_i32_0 : i32, i32
  }
  func.func @transform_3(%arg0: i32) -> (i32, i32) {
    %c0_i32 = arith.constant 0 : i32
    %c0_i32_0 = arith.constant 0 : i32
    %c0_i32_1 = arith.constant 0 : i32
    return %c0_i32, %c0_i32_0 : i32, i32
  }
  func.func @transform_4(%arg0: i32) -> (i32, i32) {
    %c0_i32 = arith.constant 0 : i32
    %c0_i32_0 = arith.constant 0 : i32
    %c0_i32_1 = arith.constant 0 : i32
    return %c0_i32, %c0_i32_0 : i32, i32
  }
  func.func @transform_5(%arg0: i32) -> (i32, i32) {
    %c0_i32 = arith.constant 0 : i32
    %c0_i32_0 = arith.constant 0 : i32
    %c0_i32_1 = arith.constant 0 : i32
    return %c0_i32, %c0_i32_0 : i32, i32
  }
  func.func @transform_6(%arg0: i32) -> (i32, i32) {
    %c0_i32 = arith.constant 0 : i32
    %c0_i32_0 = arith.constant 0 : i32
    %c0_i32_1 = arith.constant 0 : i32
    return %c0_i32, %c0_i32_0 : i32, i32
  }
  func.func @transform_7(%arg0: i32) -> (i32, i32) {
    %c0_i32 = arith.constant 0 : i32
    %c0_i32_0 = arith.constant 0 : i32
    return %arg0, %c0_i32 : i32, i32
  }
}

</mosaic_0001>

<llo_original>
// kernel: test_module_forward.1
$region0: #{test_module_forward.1}
  #allocation0 [shape = 'u32[]', space=smem, size = 0x4, offset = 0x4, fixed_abs, tag = 'smem constant byte address 0x4 - core index']
  #allocation1 [shape = 'u32[144,128]{1,0:T(1,128)}', space=vmem, size = 0x12000, scoped, tag = 'internal scratch']
  #allocation2 [shape = 'f32[1,1]{1,0:T(1,128)S(1)}', space=vmem, size = 0x200, scoped, tag = 'scoped memory for test_module_forward.1']
  %s0 = inlined_call_operand.vmem [shape: bf16[8,32], index: 0, kind: input, shape index: {}]
  %s1 = inlined_call_operand.vmem [shape: bf16[32,10], index: 1, kind: input, shape index: {}]
  %s2 = inlined_call_operand.vmem [shape: f32[1,10], index: 2, kind: input, shape index: {}]
  %s3 = inlined_call_operand.vmem [shape: f32[10,5], index: 3, kind: input, shape index: {}]
  %s4 = inlined_call_operand.vmem [shape: f32[1,5], index: 4, kind: input, shape index: {}]
  %s5 = inlined_call_operand.vmem [shape: f32[5,1], index: 5, kind: input, shape index: {}]
  %s6 = inlined_call_operand.<no memory space> [shape: f32[1,1], index: 6, kind: input, shape index: {}]
  %s7 = inlined_call_operand.vmem [shape: f32[8,1], index: 7, kind: output, shape index: {}]
  %s8 = sld [smem:[#allocation0]]
  $region38: #{test_module_forward.1} parent=0
    _
  %s10 = ssub.s32 1, %s8
  %s11 = scalar_select 0, %s10, %s8
  %v12 = vstv %s6
  %13 = vst [vmem:[#allocation2] sm:$0x1] %v12
  // Predicated region
  $region2: #{test_module_forward.1} parent=0 // pred_check
    _
  $region3: #{test_module_forward.1} parent=0 // pred_check_branch
    %15 = sbr.rel (0) target = $region5
  $region4: #{test_module_forward.1} parent=0 // pred_region
    _
  $region5: #{test_module_forward.1} parent=0 // pred_fallthru
    _
  // Predicated region
  $region6: #{test_module_forward.1} parent=0 // pred_check
    _
  $region7: #{test_module_forward.1} parent=0 // pred_check_branch
    %17 = sbr.rel (0) target = $region9
  $region8: #{test_module_forward.1} parent=0 // pred_region
    _
  $region9: #{test_module_forward.1} parent=0 // pred_fallthru
    _
  // Predicated region
  $region10: #{test_module_forward.1} parent=0 // pred_check
    _
  $region11: #{test_module_forward.1} parent=0 // pred_check_branch
    %19 = sbr.rel (0) target = $region13
  $region12: #{test_module_forward.1} parent=0 // pred_region
    _
  $region13: #{test_module_forward.1} parent=0 // pred_fallthru
    _
  // Predicated region
  $region14: #{test_module_forward.1} parent=0 // pred_check
    _
  $region15: #{test_module_forward.1} parent=0 // pred_check_branch
    %21 = sbr.rel (0) target = $region17
  $region16: #{test_module_forward.1} parent=0 // pred_region
    _
  $region17: #{test_module_forward.1} parent=0 // pred_fallthru
    _
  // Predicated region
  $region18: #{test_module_forward.1} parent=0 // pred_check
    _
  $region19: #{test_module_forward.1} parent=0 // pred_check_branch
    %23 = sbr.rel (0) target = $region21
  $region20: #{test_module_forward.1} parent=0 // pred_region
    _
  $region21: #{test_module_forward.1} parent=0 // pred_fallthru
    _
  // Predicated region
  $region22: #{test_module_forward.1} parent=0 // pred_check
    _
  $region23: #{test_module_forward.1} parent=0 // pred_check_branch
    %25 = sbr.rel (0) target = $region25
  $region24: #{test_module_forward.1} parent=0 // pred_region
    _
  $region25: #{test_module_forward.1} parent=0 // pred_fallthru
    _
  // Predicated region
  $region26: #{test_module_forward.1} parent=0 // pred_check
    _
  $region27: #{test_module_forward.1} parent=0 // pred_check_branch
    %27 = sbr.rel (0) target = $region29
  $region28: #{test_module_forward.1} parent=0 // pred_region
    _
  $region29: #{test_module_forward.1} parent=0 // pred_fallthru
    _
  %v29 = vld [vmem:[%s0] sm:$0xf]
  %v30 = vld [vmem:[%s1] sm:$0xf]
  %v31 = vld [vmem:[%s1 + $0x4] sm:$0xf]
  %v32 = vld [vmem:[%s1 + $0x8] sm:$0xf]
  %v33 = vld [vmem:[%s1 + $0xc] sm:$0xf]
  %v34 = vld [vmem:[%s2] sm:$0x1]
  %v36 = vlaneseq
  %v37 = vshrl.u32 %v36, 7
  %v38 = vsub.s32 0, %v37
  %v39 = vrot.slane %v34, %v38
  %v45 = vunpack.c.l.b16 %v30
  %v46 = vunpack.c.l.b16 %v31
  %v47 = vunpack.c.l.b16 %v32
  %v48 = vunpack.c.l.b16 %v33
  %v49 = vpack.c.b16 %v46, %v45
  %v50 = vpack.c.b16 %v48, %v47
  %vm53 = vcmask 261120
  %v55 = vsel %vm53, %v29, 0
  %57 = vmatprep.subr.bf16.mxu0 0
  %58 = vmatpush1.bf16.msra.mxu0 0
  %59 = vmatprep.subr.bf16.mxu0 0
  %60 = vmatpush1.bf16.msra.mxu0 0
  %61 = vmatprep.subr.bf16.mxu0 0
  %62 = vmatpush1.bf16.msra.mxu0 0
  %63 = vmatprep.subr.bf16.mxu0 0
  %64 = vmatpush1.bf16.msra.mxu0 0
  %65 = vmatprep.subr.bf16.mxu0 0
  %66 = vmatpush1.bf16.msra.mxu0 0
  %67 = vmatprep.subr.bf16.mxu0 0
  %68 = vmatpush1.bf16.msra.mxu0 0
  %69 = vmatprep.subr.bf16.mxu0 0
  %70 = vmatpush1.bf16.msra.mxu0 %v50
  %71 = vmatprep.subr.bf16.mxu0 0
  %72 = vmatpush1.bf16.msra.mxu0 %v49
  %73 = vmatprep.subr.bf16.mxu0 0
  %74 = vmatpush2.bf16.msra.mxu0 0
  %75 = vmatprep.subr.bf16.mxu0 0
  %76 = vmatpush2.bf16.msra.mxu0 0
  %77 = vmatprep.subr.bf16.mxu0 0
  %78 = vmatpush2.bf16.msra.mxu0 0
  %79 = vmatprep.subr.bf16.mxu0 0
  %80 = vmatpush2.bf16.msra.mxu0 0
  %81 = vmatprep.subr.bf16.mxu0 0
  %82 = vmatpush2.bf16.msra.mxu0 0
  %83 = vmatprep.subr.bf16.mxu0 0
  %84 = vmatpush2.bf16.msra.mxu0 0
  %85 = vmatprep.subr.bf16.mxu0 0
  %86 = vmatpush2.bf16.msra.mxu0 0
  %87 = vmatprep.subr.bf16.mxu0 0
  %88 = vmatpush2.bf16.msra.mxu0 0
  %89 = vmatprep.mubr.bf16.mxu0 0
  %90 = vmatmul.mubr.bf16.gmra.mxu0 %v55
  %v91 = vpop.f32.mrf.mxu0
  %v92 = vadd.f32 %v39, %v91
  %v93 = vpop.f32.mrf.mxu0
  %v94 = vpop.f32.mrf.mxu0
  %v95 = vpop.f32.mrf.mxu0
  %96 = vdwg.mxu0
  %v97 = vmax.f32 %v92, 0.0
  %v98 = vld [vmem:[%s3] sm:$0xff]
  %v99 = vld [vmem:[%s3 + $0x8] sm:$0x3]
  %v100 = vld [vmem:[%s4] sm:$0x1]
  %v102 = vlaneseq
  %v103 = vshrl.u32 %v102, 7
  %v104 = vsub.s32 0, %v103
  %v105 = vrot.slane %v100, %v104
  %vm107 = vcmask 80896
  %v109 = vsel %vm107, %v97, 0
  %vm111 = vcmask 1041408
  %v113 = vsel %vm111, %v99, 0
  %115 = vmatprep.subr.mxu0 0.0
  %116 = vmatpush1.msra.mxu0 0.0
  %117 = vmatprep.subr.mxu0 0.0
  %118 = vmatpush1.msra.mxu0 0.0
  %119 = vmatprep.subr.mxu0 0.0
  %120 = vmatpush1.msra.mxu0 0.0
  %121 = vmatprep.subr.mxu0 0.0
  %122 = vmatpush1.msra.mxu0 0.0
  %123 = vmatprep.subr.mxu0 0.0
  %124 = vmatpush1.msra.mxu0 0.0
  %125 = vmatprep.subr.mxu0 0.0
  %126 = vmatpush1.msra.mxu0 0.0
  %127 = vmatprep.subr.mxu0 0.0
  %128 = vmatpush1.msra.mxu0 0.0
  %129 = vmatprep.subr.mxu0 0.0
  %130 = vmatpush1.msra.mxu0 0.0
  %131 = vmatprep.subr.mxu0 0.0
  %132 = vmatpush1.msra.mxu0 0.0
  %133 = vmatprep.subr.mxu0 0.0
  %134 = vmatpush1.msra.mxu0 0.0
  %135 = vmatprep.subr.mxu0 0.0
  %136 = vmatpush1.msra.mxu0 0.0
  %137 = vmatprep.subr.mxu0 0.0
  %138 = vmatpush1.msra.mxu0 0.0
  %139 = vmatprep.subr.mxu0 0.0
  %140 = vmatpush1.msra.mxu0 0.0
  %141 = vmatprep.subr.mxu0 0.0
  %142 = vmatpush1.msra.mxu0 0.0
  %143 = vmatprep.subr.mxu0 0.0
  %144 = vmatpush1.msra.mxu0 %v113
  %145 = vmatprep.subr.mxu0 0.0
  %146 = vmatpush1.msra.mxu0 %v98
  %147 = vmatprep.subr.mxu0 0.0
  %148 = vmatpush2.msra.mxu0 0.0
  %149 = vmatprep.subr.mxu0 0.0
  %150 = vmatpush2.msra.mxu0 0.0
  %151 = vmatprep.subr.mxu0 0.0
  %152 = vmatpush2.msra.mxu0 0.0
  %153 = vmatprep.subr.mxu0 0.0
  %154 = vmatpush2.msra.mxu0 0.0
  %155 = vmatprep.subr.mxu0 0.0
  %156 = vmatpush2.msra.mxu0 0.0
  %157 = vmatprep.subr.mxu0 0.0
  %158 = vmatpush2.msra.mxu0 0.0
  %159 = vmatprep.subr.mxu0 0.0
  %160 = vmatpush2.msra.mxu0 0.0
  %161 = vmatprep.subr.mxu0 0.0
  %162 = vmatpush2.msra.mxu0 0.0
  %163 = vmatprep.subr.mxu0 0.0
  %164 = vmatpush2.msra.mxu0 0.0
  %165 = vmatprep.subr.mxu0 0.0
  %166 = vmatpush2.msra.mxu0 0.0
  %167 = vmatprep.subr.mxu0 0.0
  %168 = vmatpush2.msra.mxu0 0.0
  %169 = vmatprep.subr.mxu0 0.0
  %170 = vmatpush2.msra.mxu0 0.0
  %171 = vmatprep.subr.mxu0 0.0
  %172 = vmatpush2.msra.mxu0 0.0
  %173 = vmatprep.subr.mxu0 0.0
  %174 = vmatpush2.msra.mxu0 0.0
  %175 = vmatprep.subr.mxu0 0.0
  %176 = vmatpush2.msra.mxu0 0.0
  %177 = vmatprep.subr.mxu0 0.0
  %178 = vmatpush2.msra.mxu0 0.0
  %179 = vmatprep.mubr.f32.mxu0 0.0
  %180 = vmatmul.mubr.f32.gmra.mxu0 %v109
  %v181 = vpop.f32.mrf.mxu0
  %v182 = vadd.f32 %v105, %v181
  %v183 = vpop.f32.mrf.mxu0
  %184 = vdwg.mxu0
  %v185 = vmax.f32 %v182, 0.0
  %v186 = vld [vmem:[%s5] sm:$0x1f]
  %v187 = vld [vmem:[#allocation2] sm:$0x1]
  %v189 = vlaneseq
  %v190 = vshrl.u32 %v189, 7
  %v191 = vsub.s32 0, %v190
  %v192 = vrot.slane %v187, %v191
  %vm194 = vcmask 39936
  %v196 = vsel %vm194, %v185, 0
  %vm198 = vcmask 1044480
  %v200 = vsel %vm198, %v186, 0
  %202 = vmatprep.subr.mxu0 0.0
  %203 = vmatpush1.msra.mxu0 0.0
  %204 = vmatprep.subr.mxu0 0.0
  %205 = vmatpush1.msra.mxu0 0.0
  %206 = vmatprep.subr.mxu0 0.0
  %207 = vmatpush1.msra.mxu0 0.0
  %208 = vmatprep.subr.mxu0 0.0
  %209 = vmatpush1.msra.mxu0 0.0
  %210 = vmatprep.subr.mxu0 0.0
  %211 = vmatpush1.msra.mxu0 0.0
  %212 = vmatprep.subr.mxu0 0.0
  %213 = vmatpush1.msra.mxu0 0.0
  %214 = vmatprep.subr.mxu0 0.0
  %215 = vmatpush1.msra.mxu0 0.0
  %216 = vmatprep.subr.mxu0 0.0
  %217 = vmatpush1.msra.mxu0 0.0
  %218 = vmatprep.subr.mxu0 0.0
  %219 = vmatpush1.msra.mxu0 0.0
  %220 = vmatprep.subr.mxu0 0.0
  %221 = vmatpush1.msra.mxu0 0.0
  %222 = vmatprep.subr.mxu0 0.0
  %223 = vmatpush1.msra.mxu0 0.0
  %224 = vmatprep.subr.mxu0 0.0
  %225 = vmatpush1.msra.mxu0 0.0
  %226 = vmatprep.subr.mxu0 0.0
  %227 = vmatpush1.msra.mxu0 0.0
  %228 = vmatprep.subr.mxu0 0.0
  %229 = vmatpush1.msra.mxu0 0.0
  %230 = vmatprep.subr.mxu0 0.0
  %231 = vmatpush1.msra.mxu0 0.0
  %232 = vmatprep.subr.mxu0 0.0
  %233 = vmatpush1.msra.mxu0 %v200
  %234 = vmatprep.subr.mxu0 0.0
  %235 = vmatpush2.msra.mxu0 0.0
  %236 = vmatprep.subr.mxu0 0.0
  %237 = vmatpush2.msra.mxu0 0.0
  %238 = vmatprep.subr.mxu0 0.0
  %239 = vmatpush2.msra.mxu0 0.0
  %240 = vmatprep.subr.mxu0 0.0
  %241 = vmatpush2.msra.mxu0 0.0
  %242 = vmatprep.subr.mxu0 0.0
  %243 = vmatpush2.msra.mxu0 0.0
  %244 = vmatprep.subr.mxu0 0.0
  %245 = vmatpush2.msra.mxu0 0.0
  %246 = vmatprep.subr.mxu0 0.0
  %247 = vmatpush2.msra.mxu0 0.0
  %248 = vmatprep.subr.mxu0 0.0
  %249 = vmatpush2.msra.mxu0 0.0
  %250 = vmatprep.subr.mxu0 0.0
  %251 = vmatpush2.msra.mxu0 0.0
  %252 = vmatprep.subr.mxu0 0.0
  %253 = vmatpush2.msra.mxu0 0.0
  %254 = vmatprep.subr.mxu0 0.0
  %255 = vmatpush2.msra.mxu0 0.0
  %256 = vmatprep.subr.mxu0 0.0
  %257 = vmatpush2.msra.mxu0 0.0
  %258 = vmatprep.subr.mxu0 0.0
  %259 = vmatpush2.msra.mxu0 0.0
  %260 = vmatprep.subr.mxu0 0.0
  %261 = vmatpush2.msra.mxu0 0.0
  %262 = vmatprep.subr.mxu0 0.0
  %263 = vmatpush2.msra.mxu0 0.0
  %264 = vmatprep.subr.mxu0 0.0
  %265 = vmatpush2.msra.mxu0 0.0
  %266 = vmatprep.mubr.f32.mxu0 0.0
  %267 = vmatmul.mubr.f32.gmra.mxu0 %v196
  %v268 = vpop.f32.mrf.mxu0
  %v269 = vadd.f32 %v192, %v268
  %v270 = vpop.f32.mrf.mxu0
  %271 = vdwg.mxu0
  %v272 = vsub.f32 %v269, %v269
  %v273 = vmul.f32 %v272, 1.442695
  %v274 = vpow.pop %v273
  %vm275 = vcmask 7168
  %276 = vst.msk [vmem:[%s7] sm:$0xff] %vm275, %v274
  // Predicated region
  $region30: #{test_module_forward.1} parent=0 // pred_check
    _
  $region31: #{test_module_forward.1} parent=0 // pred_check_branch
    %278 = sbr.rel (0) target = $region33
  $region32: #{test_module_forward.1} parent=0 // pred_region
    _
  $region33: #{test_module_forward.1} parent=0 // pred_fallthru
    _
  // Predicated region
  $region34: #{test_module_forward.1} parent=0 // pred_check
    _
  $region35: #{test_module_forward.1} parent=0 // pred_check_branch
    %280 = sbr.rel (0) target = $region37
  $region36: #{test_module_forward.1} parent=0 // pred_region
    _
  $region37: #{test_module_forward.1} parent=0 // pred_fallthru
    _

</llo_original>
